<compile_context>
chip_gen: v7x
topology: tpu7x:2x2x1
jax: 0.10.0
libtpu: 0.0.40
codegen_flags: <defaults>
</compile_context>

<pallas_src>
import functools

import jax
import jax.numpy as jnp
from jax.experimental import pallas as pl
from jax.experimental.pallas import tpu as pltpu


def _round_up(v, m):
    return ((v + m - 1) // m) * m


def _mlp_kernel(xT_ref, w1_ref, b1_ref, w2_ref, b2_ref, w3_ref, b3_ref, o_ref,
                *, chunk):
    # Tiny, VMEM-resident parameters: load once per grid step, outside the loop.
    w1 = w1_ref[...]          # [16, 2]   (torch layout: (out, in))
    b1 = b1_ref[...]          # [16, 1]
    w2 = w2_ref[...]          # [16, 16]
    b2 = b2_ref[...]          # [16, 1]
    w3 = w3_ref[...]          # [16, 1]   (fc3 weight, transposed)
    b3 = b3_ref[...]          # [1, 1]

    n_chunks = o_ref.shape[1] // chunk    # static: tile is a multiple of chunk

    # Walk the big DMA block in lane chunks so live intermediates stay small.
    @pl.loop(0, n_chunks)
    def _(j):
        c0 = pl.multiple_of(j * chunk, 128)            # 128-aligned lane offset
        x = xT_ref[:, pl.ds(c0, chunk)]                 # [2, chunk]

        # fc1 + ReLU: K=2 contraction as two broadcast multiply-adds on the VPU.
        h1 = w1[:, 0:1] * x[0:1, :] + w1[:, 1:2] * x[1:2, :] + b1   # [16, chunk]
        h1 = jnp.maximum(h1, 0.0)

        # fc2 + ReLU: 16x16 contraction, lane-dense -> MXU with f32 accumulate.
        h2 = jnp.dot(w2, h1, preferred_element_type=jnp.float32) + b2
        h2 = jnp.maximum(h2, 0.0)                                     # [16, chunk]

        # fc3 + Sigmoid: N_out=1 -> weighted sublane reduction (stays off MXU).
        z = jnp.sum(w3 * h2, axis=0, keepdims=True) + b3              # [1, chunk]
        o_ref[:, pl.ds(c0, chunk)] = jax.nn.sigmoid(z).astype(o_ref.dtype)


def circle_classifier_forward(x, params, *, block_cols=65536, chunk_cols=1024,
                              out_dtype=jnp.float32):
    """x: [N, 2] float32. params: torch-layout weights (out, in) and biases (out,).

    block_cols: target DMA block width (batch rows per grid step).
    chunk_cols: in-kernel compute chunk width (batch rows per inner iteration).
    out_dtype:  output storage dtype (jnp.bfloat16 halves output HBM traffic).
    """
    n = x.shape[0]

    # ---- tile selection (everything forced to multiples of 128) -------------
    chunk = max(128, (int(chunk_cols) // 128) * 128)
    tile_target = max(chunk, (int(block_cols) // chunk) * chunk)
    tile = min(
        tile_target,
        _round_up(-(-n // 2), chunk),   # >=2 grid steps on big inputs (v7x megacore)
        _round_up(n, 128),              # never wider than the padded batch
    )
    tile = max(tile, 128)
    chunk = min(chunk, tile)
    tile = _round_up(tile, chunk)       # tile is a multiple of chunk
    grid = -(-n // tile)
    n_pad = grid * tile

    # Lane-dense input: one fused transpose+pad pass -> [2, n_pad].
    xT = jnp.pad(x.astype(jnp.float32).T, ((0, 0), (0, n_pad - n)))

    w1 = params["w1"].astype(jnp.float32)                    # [16, 2]
    b1 = params["b1"].astype(jnp.float32).reshape(16, 1)
    w2 = params["w2"].astype(jnp.float32)                    # [16, 16]
    b2 = params["b2"].astype(jnp.float32).reshape(16, 1)
    w3 = params["w3"].astype(jnp.float32).T                  # [1, 16] -> [16, 1]
    b3 = params["b3"].astype(jnp.float32).reshape(1, 1)

    const = lambda shape: pl.BlockSpec(shape, lambda i: (0, 0))

    out = pl.pallas_call(
        functools.partial(_mlp_kernel, chunk=chunk),
        out_shape=jax.ShapeDtypeStruct((1, n_pad), out_dtype),
        grid=(grid,),
        in_specs=[
            pl.BlockSpec((2, tile), lambda i: (0, i)),   # x stream, pipelined
            const((16, 2)), const((16, 1)),              # fc1 params, resident
            const((16, 16)), const((16, 1)),             # fc2 params, resident
            const((16, 1)), const((1, 1)),               # fc3 params, resident
        ],
        out_specs=pl.BlockSpec((1, tile), lambda i: (0, i)),
        compiler_params=pltpu.CompilerParams(
            dimension_semantics=("parallel",),
            vmem_limit_bytes=32 * 1024 * 1024,
        ),
    )(xT, w1, b1, w2, b2, w3, b3)

    return out[0, :n].reshape(n, 1)


def init_params(key):
    """Deterministic init mirroring nn.Linear: weights (out, in), biases (out,)."""
    ks = jax.random.split(key, 6)

    def uniform(k, shape, fan_in):
        bound = 1.0 / jnp.sqrt(fan_in)
        return jax.random.uniform(k, shape, jnp.float32, -bound, bound)

    return {
        "w1": uniform(ks[0], (16, 2), 2),   "b1": uniform(ks[1], (16,), 2),
        "w2": uniform(ks[2], (16, 16), 16), "b2": uniform(ks[3], (16,), 16),
        "w3": uniform(ks[4], (1, 16), 16),  "b3": uniform(ks[5], (1,), 16),
    }


def _reference_forward(x, p):
    h1 = jnp.maximum(x @ p["w1"].T + p["b1"], 0.0)
    h2 = jnp.maximum(h1 @ p["w2"].T + p["b2"], 0.0)
    return jax.nn.sigmoid(h2 @ p["w3"].T + p["b3"])


if __name__ == "__main__":
    key = jax.random.PRNGKey(0)
    k_x, k_x2, k_x3, k_p = jax.random.split(key, 4)
    params = init_params(k_p)

    # Small shape consistent with the module: batch=8, in_features=2.
    x = jax.random.normal(k_x, (8, 2), dtype=jnp.float32)
    out = jax.block_until_ready(circle_classifier_forward(x, params))
    ref = _reference_forward(x, params)
    assert out.shape == (8, 1)
    assert jnp.allclose(out, ref, atol=1e-5, rtol=1e-5)

    # Exercise multi-grid-step + multi-chunk + padding (N=300, tile=256, chunk=128).
    x2 = jax.random.normal(k_x2, (300, 2), dtype=jnp.float32)
    out2 = jax.block_until_ready(
        circle_classifier_forward(x2, params, block_cols=256, chunk_cols=128))
    ref2 = _reference_forward(x2, params)
    assert out2.shape == (300, 1)
    assert jnp.allclose(out2, ref2, atol=1e-5, rtol=1e-5)

    # Default (large-tile) configuration on a modest batch.
    x3 = jax.random.normal(k_x3, (1000, 2), dtype=jnp.float32)
    out3 = jax.block_until_ready(circle_classifier_forward(x3, params))
    ref3 = _reference_forward(x3, params)
    assert out3.shape == (1000, 1)
    assert jnp.allclose(out3, ref3, atol=1e-5, rtol=1e-5)

    print("KERNEL_OK")
</pallas_src>

<mosaic_0001>
module attributes {stable_mosaic.version = 11 : i64} {
  func.func @_mlp_kernel(%arg0: i32, %arg1: memref<2x128xf32, #tpu.memory_space<vmem>>, %arg2: memref<16x2xf32, #tpu.memory_space<vmem>>, %arg3: memref<16x1xf32, #tpu.memory_space<vmem>>, %arg4: memref<16x16xf32, #tpu.memory_space<vmem>>, %arg5: memref<16x1xf32, #tpu.memory_space<vmem>>, %arg6: memref<16x1xf32, #tpu.memory_space<vmem>>, %arg7: memref<1x1xf32, #tpu.memory_space<vmem>>, %arg8: memref<1x128xf32, #tpu.memory_space<vmem>>) attributes {dimension_semantics = [#tpu.dimension_semantics<parallel>], iteration_bounds = array<i64: 1>, scalar_prefetch = 0 : i64, scratch_operands = 0 : i64, tpu.core_type = #tpu.core_type<tc>, window_params = [{transform_indices = @transform_0, window_bounds = array<i64: 2, 128>}, {pipeline_mode = #tpu.pipeline_mode<synchronous>, transform_indices = @transform_1, window_bounds = array<i64: 16, 2>}, {pipeline_mode = #tpu.pipeline_mode<synchronous>, transform_indices = @transform_2, window_bounds = array<i64: 16, 1>}, {pipeline_mode = #tpu.pipeline_mode<synchronous>, transform_indices = @transform_3, window_bounds = array<i64: 16, 16>}, {pipeline_mode = #tpu.pipeline_mode<synchronous>, transform_indices = @transform_4, window_bounds = array<i64: 16, 1>}, {pipeline_mode = #tpu.pipeline_mode<synchronous>, transform_indices = @transform_5, window_bounds = array<i64: 16, 1>}, {pipeline_mode = #tpu.pipeline_mode<synchronous>, transform_indices = @transform_6, window_bounds = array<i64: 1, 1>}, {transform_indices = @transform_7, window_bounds = array<i64: 1, 128>}]} {
    %c0 = arith.constant 0 : index
    %c0_0 = arith.constant 0 : index
    %0 = vector.load %arg2[%c0, %c0_0] : memref<16x2xf32, #tpu.memory_space<vmem>>, vector<16x2xf32>
    %c0_1 = arith.constant 0 : index
    %c0_2 = arith.constant 0 : index
    %1 = vector.load %arg3[%c0_1, %c0_2] : memref<16x1xf32, #tpu.memory_space<vmem>>, vector<16x1xf32>
    %c0_3 = arith.constant 0 : index
    %c0_4 = arith.constant 0 : index
    %2 = vector.load %arg4[%c0_3, %c0_4] : memref<16x16xf32, #tpu.memory_space<vmem>>, vector<16x16xf32>
    %c0_5 = arith.constant 0 : index
    %c0_6 = arith.constant 0 : index
    %3 = vector.load %arg5[%c0_5, %c0_6] : memref<16x1xf32, #tpu.memory_space<vmem>>, vector<16x1xf32>
    %c0_7 = arith.constant 0 : index
    %c0_8 = arith.constant 0 : index
    %4 = vector.load %arg6[%c0_7, %c0_8] : memref<16x1xf32, #tpu.memory_space<vmem>>, vector<16x1xf32>
    %c0_9 = arith.constant 0 : index
    %c0_10 = arith.constant 0 : index
    %5 = vector.load %arg7[%c0_9, %c0_10] : memref<1x1xf32, #tpu.memory_space<vmem>>, vector<1x1xf32>
    %c0_i32 = arith.constant 0 : i32
    %c1_i32 = arith.constant 1 : i32
    %6 = arith.muli %c0_i32, %c1_i32 : i32
    %c0_i32_11 = arith.constant 0 : i32
    %7 = arith.addi %c0_i32_11, %6 : i32
    %c128_i32 = arith.constant 128 : i32
    %8 = arith.muli %7, %c128_i32 : i32
    %9 = tpu.assume_multiple %8, 128 : i32
    %c0_12 = arith.constant 0 : index
    %10 = arith.index_cast %9 : i32 to index
    %11 = vector.load %arg1[%c0_12, %10] : memref<2x128xf32, #tpu.memory_space<vmem>>, vector<2x128xf32>
    %12 = vector.extract_strided_slice %0 {offsets = [0, 0], sizes = [16, 1], strides = [1, 1]} : vector<16x2xf32> to vector<16x1xf32>
    %13 = vector.extract_strided_slice %11 {offsets = [0, 0], sizes = [1, 128], strides = [1, 1]} : vector<2x128xf32> to vector<1x128xf32>
    %14 = vector.broadcast %12 : vector<16x1xf32> to vector<16x128xf32>
    %15 = vector.broadcast %13 : vector<1x128xf32> to vector<16x128xf32>
    %16 = arith.mulf %14, %15 : vector<16x128xf32>
    %17 = vector.extract_strided_slice %0 {offsets = [0, 1], sizes = [16, 1], strides = [1, 1]} : vector<16x2xf32> to vector<16x1xf32>
    %18 = vector.extract_strided_slice %11 {offsets = [1, 0], sizes = [1, 128], strides = [1, 1]} : vector<2x128xf32> to vector<1x128xf32>
    %19 = vector.broadcast %17 : vector<16x1xf32> to vector<16x128xf32>
    %20 = vector.broadcast %18 : vector<1x128xf32> to vector<16x128xf32>
    %21 = arith.mulf %19, %20 : vector<16x128xf32>
    %22 = arith.addf %16, %21 : vector<16x128xf32>
    %23 = vector.broadcast %1 : vector<16x1xf32> to vector<16x128xf32>
    %24 = arith.addf %22, %23 : vector<16x128xf32>
    %cst = arith.constant 0.000000e+00 : f32
    %25 = vector.broadcast %cst : f32 to vector<16x128xf32>
    %26 = arith.maximumf %24, %25 : vector<16x128xf32>
    %cst_13 = arith.constant dense<0.000000e+00> : vector<16x128xf32>
    %27 = tpu.matmul %2, %26, %cst_13 {dimension_numbers = #tpu.dot_dimension_numbers<[1], [0], [0], [1], [0, 0, 1, 1], [], []>} : vector<16x16xf32>, vector<16x128xf32>, vector<16x128xf32> -> vector<16x128xf32>
    %28 = vector.broadcast %3 : vector<16x1xf32> to vector<16x128xf32>
    %29 = arith.addf %27, %28 : vector<16x128xf32>
    %cst_14 = arith.constant 0.000000e+00 : f32
    %30 = vector.broadcast %cst_14 : f32 to vector<16x128xf32>
    %31 = arith.maximumf %29, %30 : vector<16x128xf32>
    %32 = vector.broadcast %4 : vector<16x1xf32> to vector<16x128xf32>
    %33 = arith.mulf %32, %31 : vector<16x128xf32>
    %cst_15 = arith.constant dense<0.000000e+00> : vector<128xf32>
    %34 = vector.multi_reduction <add>, %33, %cst_15 [0] : vector<16x128xf32> to vector<128xf32>
    %35 = vector.shape_cast %34 : vector<128xf32> to vector<1x128xf32>
    %36 = vector.broadcast %5 : vector<1x1xf32> to vector<1x128xf32>
    %37 = arith.addf %35, %36 : vector<1x128xf32>
    %38 = arith.negf %37 : vector<1x128xf32>
    %39 = math.exp %38 : vector<1x128xf32>
    %cst_16 = arith.constant 1.000000e+00 : f32
    %40 = vector.broadcast %cst_16 : f32 to vector<1x128xf32>
    %41 = arith.addf %40, %39 : vector<1x128xf32>
    %42 = arith.divf %40, %41 : vector<1x128xf32>
    %c0_17 = arith.constant 0 : index
    %43 = arith.index_cast %9 : i32 to index
    %44 = vector.load %arg8[%c0_17, %43] : memref<1x128xf32, #tpu.memory_space<vmem>>, vector<1x128xf32>
    tpu.vector_store %arg8[%c0_17, %43], %42 {strides = array<i32>} : memref<1x128xf32, #tpu.memory_space<vmem>>, vector<1x128xf32>,
    %c1_i32_18 = arith.constant 1 : i32
    return
  }
  func.func @transform_0(%arg0: i32) -> (i32, i32) {
    %c0_i32 = arith.constant 0 : i32
    %c0_i32_0 = arith.constant 0 : i32
    return %c0_i32, %arg0 : i32, i32
  }
  func.func @transform_1(%arg0: i32) -> (i32, i32) {
    %c0_i32 = arith.constant 0 : i32
    %c0_i32_0 = arith.constant 0 : i32
    %c0_i32_1 = arith.constant 0 : i32
    return %c0_i32, %c0_i32_0 : i32, i32
  }
  func.func @transform_2(%arg0: i32) -> (i32, i32) {
    %c0_i32 = arith.constant 0 : i32
    %c0_i32_0 = arith.constant 0 : i32
    %c0_i32_1 = arith.constant 0 : i32
    return %c0_i32, %c0_i32_0 : i32, i32
  }
  func.func @transform_3(%arg0: i32) -> (i32, i32) {
    %c0_i32 = arith.constant 0 : i32
    %c0_i32_0 = arith.constant 0 : i32
    %c0_i32_1 = arith.constant 0 : i32
    return %c0_i32, %c0_i32_0 : i32, i32
  }
  func.func @transform_4(%arg0: i32) -> (i32, i32) {
    %c0_i32 = arith.constant 0 : i32
    %c0_i32_0 = arith.constant 0 : i32
    %c0_i32_1 = arith.constant 0 : i32
    return %c0_i32, %c0_i32_0 : i32, i32
  }
  func.func @transform_5(%arg0: i32) -> (i32, i32) {
    %c0_i32 = arith.constant 0 : i32
    %c0_i32_0 = arith.constant 0 : i32
    %c0_i32_1 = arith.constant 0 : i32
    return %c0_i32, %c0_i32_0 : i32, i32
  }
  func.func @transform_6(%arg0: i32) -> (i32, i32) {
    %c0_i32 = arith.constant 0 : i32
    %c0_i32_0 = arith.constant 0 : i32
    %c0_i32_1 = arith.constant 0 : i32
    return %c0_i32, %c0_i32_0 : i32, i32
  }
  func.func @transform_7(%arg0: i32) -> (i32, i32) {
    %c0_i32 = arith.constant 0 : i32
    %c0_i32_0 = arith.constant 0 : i32
    return %c0_i32, %arg0 : i32, i32
  }
}

</mosaic_0001>

<llo_original>
// kernel: tpu_custom_call.1
$region0: #{tpu_custom_call.1}
  #allocation0 [shape = 'u32[]', space=smem, size = 0x4, offset = 0x4, fixed_abs, tag = 'smem constant byte address 0x4 - core index']
  #allocation1 [shape = 'u32[144,128]{1,0:T(1,128)}', space=vmem, size = 0x12000, scoped, tag = 'internal scratch']
  #allocation2 [shape = 'f32[1,1]{1,0:T(1,128)S(1)}', space=vmem, size = 0x200, scoped, tag = 'scoped memory for tpu_custom_call.1']
  %s0 = inlined_call_operand.vmem [shape: f32[2,128], index: 0, kind: input, shape index: {}]
  %s1 = inlined_call_operand.vmem [shape: f32[16,2], index: 1, kind: input, shape index: {}]
  %s2 = inlined_call_operand.vmem [shape: f32[16,1], index: 2, kind: input, shape index: {}]
  %s3 = inlined_call_operand.vmem [shape: f32[16,16], index: 3, kind: input, shape index: {}]
  %s4 = inlined_call_operand.vmem [shape: f32[16,1], index: 4, kind: input, shape index: {}]
  %s5 = inlined_call_operand.vmem [shape: f32[16,1], index: 5, kind: input, shape index: {}]
  %s6 = inlined_call_operand.<no memory space> [shape: f32[1,1], index: 6, kind: input, shape index: {}]
  %s7 = inlined_call_operand.hbm [shape: f32[1,128], index: 7, kind: output, shape index: {}]
  %s8 = sld [smem:[#allocation0]]
  $region38: #{tpu_custom_call.1} parent=0
    _
  %s10 = ssub.s32 1, %s8
  %s11 = scalar_select 0, %s10, %s8
  %v12 = vstv %s6
  %13 = vst [vmem:[#allocation2] sm:$0x1] %v12
  $region1: #{tpu_custom_call.1} parent=0
    #allocation3 [shape = 'u8[512]{0}', space=vmem, size = 0x400, scoped, tag = 'output window, operand 0, single buffered']
    #allocation4 [shape = 's32[1]{0}', space=sflag, size = 0x4, scoped, tag = 'scoped memory for tpu_custom_call.1']
    %14 = vsyncpa [#allocation4], 0
    // Predicated region
    $region2: #{tpu_custom_call.1} parent=1 // pred_check
      _
    $region3: #{tpu_custom_call.1} parent=1 // pred_check_branch
      %16 = sbr.rel (0) target = $region5
    $region4: #{tpu_custom_call.1} parent=1 // pred_region
      _
    $region5: #{tpu_custom_call.1} parent=1 // pred_fallthru
      _
    // Predicated region
    $region6: #{tpu_custom_call.1} parent=1 // pred_check
      _
    $region7: #{tpu_custom_call.1} parent=1 // pred_check_branch
      %18 = sbr.rel (0) target = $region9
    $region8: #{tpu_custom_call.1} parent=1 // pred_region
      _
    $region9: #{tpu_custom_call.1} parent=1 // pred_fallthru
      _
    // Predicated region
    $region10: #{tpu_custom_call.1} parent=1 // pred_check
      _
    $region11: #{tpu_custom_call.1} parent=1 // pred_check_branch
      %20 = sbr.rel (0) target = $region13
    $region12: #{tpu_custom_call.1} parent=1 // pred_region
      _
    $region13: #{tpu_custom_call.1} parent=1 // pred_fallthru
      _
    // Predicated region
    $region14: #{tpu_custom_call.1} parent=1 // pred_check
      _
    $region15: #{tpu_custom_call.1} parent=1 // pred_check_branch
      %22 = sbr.rel (0) target = $region17
    $region16: #{tpu_custom_call.1} parent=1 // pred_region
      _
    $region17: #{tpu_custom_call.1} parent=1 // pred_fallthru
      _
    // Predicated region
    $region18: #{tpu_custom_call.1} parent=1 // pred_check
      _
    $region19: #{tpu_custom_call.1} parent=1 // pred_check_branch
      %24 = sbr.rel (0) target = $region21
    $region20: #{tpu_custom_call.1} parent=1 // pred_region
      _
    $region21: #{tpu_custom_call.1} parent=1 // pred_fallthru
      _
    // Predicated region
    $region22: #{tpu_custom_call.1} parent=1 // pred_check
      _
    $region23: #{tpu_custom_call.1} parent=1 // pred_check_branch
      %26 = sbr.rel (0) target = $region25
    $region24: #{tpu_custom_call.1} parent=1 // pred_region
      _
    $region25: #{tpu_custom_call.1} parent=1 // pred_fallthru
      _
    // Predicated region
    $region26: #{tpu_custom_call.1} parent=1 // pred_check
      _
    $region27: #{tpu_custom_call.1} parent=1 // pred_check_branch
      %28 = sbr.rel (0) target = $region29
    $region28: #{tpu_custom_call.1} parent=1 // pred_region
      _
    $region29: #{tpu_custom_call.1} parent=1 // pred_fallthru
      _
    %v29 = vld [vmem:[%s1] sm:$0xff]
    %v30 = vld [vmem:[%s1 + $0x8] sm:$0xff]
    %v31 = vld [vmem:[%s2] sm:$0xff]
    %v32 = vld [vmem:[%s2 + $0x8] sm:$0xff]
    %v33 = vld [vmem:[%s3] sm:$0xff]
    %v34 = vld [vmem:[%s3 + $0x8] sm:$0xff]
    %v35 = vld [vmem:[%s4] sm:$0xff]
    %v36 = vld [vmem:[%s4 + $0x8] sm:$0xff]
    %v37 = vld [vmem:[%s5] sm:$0xff]
    %v38 = vld [vmem:[%s5 + $0x8] sm:$0xff]
    %v39 = vld [vmem:[#allocation2] sm:$0x1]
    %v40 = vld [vmem:[%s0] sm:$0x3]
    %42 = vset.pattern.permute.xlu0 0
    %43 = vperm.xlu0 %42, %v29
    %v44 = vpop.permute.xlu0 %43
    %47 = vset.pattern.permute.xlu0 0
    %48 = vperm.xlu0 %47, %v30
    %v49 = vpop.permute.xlu0 %48
    %v51 = vlaneseq
    %v52 = vshrl.u32 %v51, 7
    %v53 = vsub.s32 0, %v52
    %v54 = vrot.slane %v40, %v53
    %v55 = vmul.f32 %v44, %v54
    %v56 = vmul.f32 %v49, %v54
    %57 = vset.pattern.permute.xlu0 1
    %58 = vperm.xlu0 %57, %v29
    %v59 = vpop.permute.xlu0 %58
    %61 = vset.pattern.permute.xlu0 1
    %62 = vperm.xlu0 %61, %v30
    %v63 = vpop.permute.xlu0 %62
    %v65 = vlaneseq
    %v66 = vshrl.u32 %v65, 7
    %v67 = vsub.s32 1, %v66
    %v68 = vrot.slane %v40, %v67
    %v69 = vmul.f32 %v59, %v68
    %v70 = vmul.f32 %v63, %v68
    %v71 = vadd.f32 %v55, %v69
    %v72 = vadd.f32 %v56, %v70
    %74 = vset.pattern.permute.xlu0 0
    %75 = vperm.xlu0 %74, %v31
    %v76 = vpop.permute.xlu0 %75
    %79 = vset.pattern.permute.xlu0 0
    %80 = vperm.xlu0 %79, %v32
    %v81 = vpop.permute.xlu0 %80
    %v83 = vadd.f32 %v71, %v76
    %v84 = vadd.f32 %v72, %v81
    %v85 = vmax.f32 %v83, 0.0
    %v86 = vmax.f32 %v84, 0.0
    %88 = vset.pattern.permute.xlu0 0
    %89 = vperm.xlu0 %88, %v35
    %v90 = vpop.permute.xlu0 %89
    %93 = vset.pattern.permute.xlu0 0
    %94 = vperm.xlu0 %93, %v36
    %v95 = vpop.permute.xlu0 %94
    %vm97 = vcmask 130048
    %v99 = vsel %vm97, %v33, 0
    %v102 = vsel %vm97, %v34, 0
    %104 = vmatprep.subr.mxu0 0.0
    %105 = vmatpush1.msra.mxu0 %v85
    %106 = vmatprep.subr.mxu0 0.0
    %107 = vmatpush1.msra.mxu0 %v86
    %108 = vmatprep.subr.mxu0 0.0
    %109 = vmatpush1.msra.mxu0 0.0
    %110 = vmatprep.subr.mxu0 0.0
    %111 = vmatpush1.msra.mxu0 0.0
    %112 = vmatprep.subr.mxu0 0.0
    %113 = vmatpush1.msra.mxu0 0.0
    %114 = vmatprep.subr.mxu0 0.0
    %115 = vmatpush1.msra.mxu0 0.0
    %116 = vmatprep.subr.mxu0 0.0
    %117 = vmatpush1.msra.mxu0 0.0
    %118 = vmatprep.subr.mxu0 0.0
    %119 = vmatpush1.msra.mxu0 0.0
    %120 = vmatprep.subr.mxu0 0.0
    %121 = vmatpush1.msra.mxu0 0.0
    %122 = vmatprep.subr.mxu0 0.0
    %123 = vmatpush1.msra.mxu0 0.0
    %124 = vmatprep.subr.mxu0 0.0
    %125 = vmatpush1.msra.mxu0 0.0
    %126 = vmatprep.subr.mxu0 0.0
    %127 = vmatpush1.msra.mxu0 0.0
    %128 = vmatprep.subr.mxu0 0.0
    %129 = vmatpush1.msra.mxu0 0.0
    %130 = vmatprep.subr.mxu0 0.0
    %131 = vmatpush1.msra.mxu0 0.0
    %132 = vmatprep.subr.mxu0 0.0
    %133 = vmatpush1.msra.mxu0 0.0
    %134 = vmatprep.subr.mxu0 0.0
    %135 = vmatpush1.msra.mxu0 0.0
    %136 = vmatprep.subr.mxu0 0.0
    %137 = vmatpush1.msra.mxu0 0.0
    %138 = vmatprep.subr.mxu0 0.0
    %139 = vmatpush1.msra.mxu0 0.0
    %140 = vmatprep.subr.mxu0 0.0
    %141 = vmatpush1.msra.mxu0 0.0
    %142 = vmatprep.subr.mxu0 0.0
    %143 = vmatpush1.msra.mxu0 0.0
    %144 = vmatprep.subr.mxu0 0.0
    %145 = vmatpush1.msra.mxu0 0.0
    %146 = vmatprep.subr.mxu0 0.0
    %147 = vmatpush1.msra.mxu0 0.0
    %148 = vmatprep.subr.mxu0 0.0
    %149 = vmatpush1.msra.mxu0 0.0
    %150 = vmatprep.subr.mxu0 0.0
    %151 = vmatpush1.msra.mxu0 0.0
    %152 = vmatprep.subr.mxu0 0.0
    %153 = vmatpush1.msra.mxu0 0.0
    %154 = vmatprep.subr.mxu0 0.0
    %155 = vmatpush1.msra.mxu0 0.0
    %156 = vmatprep.subr.mxu0 0.0
    %157 = vmatpush1.msra.mxu0 0.0
    %158 = vmatprep.subr.mxu0 0.0
    %159 = vmatpush1.msra.mxu0 0.0
    %160 = vmatprep.subr.mxu0 0.0
    %161 = vmatpush1.msra.mxu0 0.0
    %162 = vmatprep.subr.mxu0 0.0
    %163 = vmatpush1.msra.mxu0 0.0
    %164 = vmatprep.subr.mxu0 0.0
    %165 = vmatpush1.msra.mxu0 0.0
    %166 = vmatprep.subr.mxu0 0.0
    %167 = vmatpush1.msra.mxu0 0.0
    %168 = vmatprep.mubr.f32.mxu0 0.0
    %169 = vmatmul.mubr.f32.gmra.mrb[0].mxu0 %v99
    %v170 = vpop.f32.mrb[0].mxu0
    %v171 = vadd.f32 %v90, %v170
    %v172 = vpop.f32.mrb[0].mxu0
    %173 = vmatprep.mubr.f32.mxu0 0.0
    %174 = vmatmul.mubr.f32.gmra.mrb[0].mxu0 %v102
    %v175 = vpop.f32.mrb[0].mxu0
    %v176 = vadd.f32 %v95, %v175
    %v177 = vpop.f32.mrb[0].mxu0
    %178 = vdwg.mxu0
    %v179 = vmax.f32 %v171, 0.0
    %v180 = vmax.f32 %v176, 0.0
    %182 = vset.pattern.permute.xlu0 0
    %183 = vperm.xlu0 %182, %v37
    %v184 = vpop.permute.xlu0 %183
    %187 = vset.pattern.permute.xlu0 0
    %188 = vperm.xlu0 %187, %v38
    %v189 = vpop.permute.xlu0 %188
    %v191 = vmul.f32 %v184, %v179
    %v192 = vmul.f32 %v189, %v180
    %v193 = vadd.f32 %v191, %v192
    %v194 = vrot.slane %v193, 4
    %v195 = vadd.f32 %v193, %v194
    %v196 = vrot.slane %v195, 2
    %v197 = vadd.f32 %v195, %v196
    %v198 = vrot.slane %v197, 1
    %v199 = vadd.f32 %v197, %v198
    %201 = vset.pattern.permute.xlu0 0
    %202 = vperm.xlu0 %201, %v39
    %v203 = vpop.permute.xlu0 %202
    %v205 = vlaneseq
    %v206 = vshrl.u32 %v205, 7
    %v207 = vsub.s32 0, %v206
    %v208 = vrot.slane %v203, %v207
    %v209 = vadd.f32 %v199, %v208
    %v210 = vxor.u32 %v209, 2147483648
    %v211 = vmul.f32 %v210, 1.442695
    %v212 = vpow.pop %v211
    %v213 = vadd.f32 %v212, 1.0
    %v214 = vrcp.pop %v213
    %v215 = vmul.f32 1.0, %v214
    %216 = vst [vmem:[#allocation3] sm:$0x1] %v215
    // Predicated region
    $region30: #{tpu_custom_call.1} parent=1 // pred_check
      _
    $region31: #{tpu_custom_call.1} parent=1 // pred_check_branch
      %218 = sbr.rel (0) target = $region33
    $region32: #{tpu_custom_call.1} parent=1 // pred_region
      %s220 = ssub.s32 16, 16
      %221 = vsyncadd [#allocation4], %s220
      %s223 = sshll.u32 [#allocation3], 4
      %s224 = int_to_ptr.vmem [resolvable:$true] %s223
      %226 = dma.vmem_to_hbm [thread:$0]  %s224, 16, %s7, [#allocation4]
    $region33: #{tpu_custom_call.1} parent=1 // pred_fallthru
      _
    // Predicated region
    $region34: #{tpu_custom_call.1} parent=1 // pred_check
      _
    $region35: #{tpu_custom_call.1} parent=1 // pred_check_branch
      %228 = sbr.rel (0) target = $region37
    $region36: #{tpu_custom_call.1} parent=1 // pred_region
      %229 = dma.done [#allocation4], 16
    $region37: #{tpu_custom_call.1} parent=1 // pred_fallthru
      _
    %230 = vsyncpa [#allocation4], 1

</llo_original>
